<compile_context>
chip_gen: v7x
topology: tpu7x:2x2x1
jax: 0.10.0
libtpu: 0.0.40
codegen_flags: <defaults>
</compile_context>

<pallas_src>
import jax
import jax.numpy as jnp
from jax.experimental import pallas as pl
from jax.experimental.pallas import tpu as pltpu


# ----------------------------- Pallas kernel -------------------------------- #
def _lstm_mlp_kernel(
    x_ref,      # (T*Bp, F)   bf16, time-major, pre-flattened in the wrapper
    wih_ref,    # (F, 4H)     bf16 LSTM input weights (g-quarter cols pre-scaled by 2)
    whh_ref,    # (H, 4H)     bf16 LSTM recurrent weights (g-quarter cols pre-scaled by 2)
    mlpw_ref,   # (2H, H)     bf16: rows [0:H) = Linear1 (BN1 folded), [H:2H) = Linear2 (BN2 folded)
    vecs_ref,   # (8, >=128)  f32 packed small params:
                #   row0[:4H] = b_ih+b_hh (g-quarter *2), row1[:H] = b1 fold,
                #   row2[:H]  = b2 fold,  row3[:H] = w3 row, row4[0] = b3
    out_ref,    # (Bp, 1)     f32
):
    H = whh_ref.shape[0]
    Bp = out_ref.shape[0]
    TB = x_ref.shape[0]
    T = TB // Bp

    whh = whh_ref[...]                                       # stays resident across steps
    b_lstm = vecs_ref[0:1, 0:4 * H]                          # (1, 4H)

    # --- Input projection hoisted out of the recurrence ---------------------
    # One (T*Bp, F) x (F, 4H) bf16 MXU op with f32 accumulation; bias added once.
    xw = jnp.dot(x_ref[...], wih_ref[...],
                 preferred_element_type=jnp.float32) + b_lstm   # (T*Bp, 4H) f32

    h = jnp.zeros((Bp, H), jnp.float32)
    c = jnp.zeros((Bp, H), jnp.float32)

    # --- Recurrence: fully unrolled (T is static & small) -------------------
    # Only h @ W_hh + elementwise remain on the serial carried path.
    for t in range(T):
        gates = xw[t * Bp:(t + 1) * Bp, :] + jnp.dot(
            h.astype(whh.dtype), whh, preferred_element_type=jnp.float32)  # (Bp, 4H)
        # Single full-width EUP pass; tanh(g) recovered from the pre-scaled
        # sigmoid on the VPU: tanh(g) = 2*sigmoid(2g) - 1.
        sg = jax.nn.sigmoid(gates)
        i_g = sg[:, 0 * H:1 * H]
        f_g = sg[:, 1 * H:2 * H]
        g_g = 2.0 * sg[:, 2 * H:3 * H] - 1.0
        o_g = sg[:, 3 * H:4 * H]
        c = f_g * c + i_g * g_g
        h = o_g * jnp.tanh(c)                                  # only (Bp, H) tanh remains

    # --- MLP head (BatchNorm folded; Dropout == identity in eval) -----------
    w1 = mlpw_ref[0:H, :]
    w2 = mlpw_ref[H:2 * H, :]
    b1 = vecs_ref[1:2, 0:H]
    b2 = vecs_ref[2:3, 0:H]
    w3 = vecs_ref[3:4, 0:H]
    b3 = vecs_ref[4:5, 0:1]

    z = jnp.dot(h.astype(w1.dtype), w1, preferred_element_type=jnp.float32) + b1
    z = jnp.maximum(z, 0.0)
    z = jnp.dot(z.astype(w2.dtype), w2, preferred_element_type=jnp.float32) + b2
    z = jnp.maximum(z, 0.0)

    # Final Linear(H -> 1): VPU multiply + lane reduction instead of an N=1 matmul.
    logit = jnp.sum(z * w3, axis=-1, keepdims=True) + b3
    out_ref[...] = jax.nn.sigmoid(logit)


# ------------------------------- Wrapper ------------------------------------ #
@jax.jit
def lstm_network_forward(x, params):
    """x: (B, T, F) float32, batch_first (matches PyTorch). Returns (B, 1)."""
    B, T, F = x.shape
    H = params["w_hh"].shape[1]                  # PyTorch weight_hh_l0: (4H, H)

    # Pad batch to a full sublane group (8) so every matmul/store is unmasked.
    Bp = max(8, ((B + 7) // 8) * 8)
    x_tm = jnp.transpose(x, (1, 0, 2)).astype(jnp.float32)        # (T, B, F)
    if Bp != B:
        x_tm = jnp.pad(x_tm, ((0, 0), (0, Bp - B), (0, 0)))
    # Pre-flatten in the wrapper (free XLA plumbing; avoids an in-kernel reshape)
    # and cast to bf16 for the MXU (f32 accumulation inside the kernel).
    x_flat = x_tm.reshape(T * Bp, F).astype(jnp.bfloat16)          # (T*Bp, F)

    # LSTM weights: pre-transpose to (in, out); fuse the two biases; pre-scale
    # the g-gate quarter by 2 so the kernel can compute tanh(g) = 2*sigmoid(2g)-1.
    gate_scale = jnp.concatenate([
        jnp.ones((2 * H,), jnp.float32),
        jnp.full((H,), 2.0, jnp.float32),
        jnp.ones((H,), jnp.float32)])                              # (4H,)
    wih_t = (params["w_ih"].T.astype(jnp.float32)
             * gate_scale[None, :]).astype(jnp.bfloat16)           # (F, 4H)
    whh_t = (params["w_hh"].T.astype(jnp.float32)
             * gate_scale[None, :]).astype(jnp.bfloat16)           # (H, 4H)
    b_lstm = ((params["b_ih"] + params["b_hh"]).astype(jnp.float32)
              * gate_scale)                                        # (4H,)

    # Fold eval-mode BatchNorm1d into the preceding Linear (exact in eval mode).
    eps = 1e-5
    s1 = params["bn1_gamma"] * jax.lax.rsqrt(params["bn1_var"] + eps)
    w1f = params["w1"].T.astype(jnp.float32) * s1[None, :]          # (H, H)
    b1f = (params["b1"] - params["bn1_mean"]) * s1 + params["bn1_beta"]
    s2 = params["bn2_gamma"] * jax.lax.rsqrt(params["bn2_var"] + eps)
    w2f = params["w2"].T.astype(jnp.float32) * s2[None, :]          # (H, H)
    b2f = (params["b2"] - params["bn2_mean"]) * s2 + params["bn2_beta"]

    # Pack the two MLP matrices into one array (one DMA instead of two).
    mlpw = jnp.concatenate([w1f, w2f], axis=0).astype(jnp.bfloat16)  # (2H, H)

    # Pack all small vectors into a single (8, >=128) f32 tile (one DMA, one tile).
    vec_w = max(128, 4 * H)
    vecs = jnp.zeros((8, vec_w), jnp.float32)
    vecs = vecs.at[0, :4 * H].set(b_lstm)
    vecs = vecs.at[1, :H].set(b1f.astype(jnp.float32))
    vecs = vecs.at[2, :H].set(b2f.astype(jnp.float32))
    vecs = vecs.at[3, :H].set(params["w3"].reshape(-1).astype(jnp.float32))
    vecs = vecs.at[4, 0].set(params["b3"].reshape(()).astype(jnp.float32))

    args = (x_flat, wih_t, whh_t, mlpw, vecs)

    vmem = pl.BlockSpec(memory_space=pltpu.MemorySpace.VMEM)
    out_padded = pl.pallas_call(
        _lstm_mlp_kernel,
        out_shape=jax.ShapeDtypeStruct((Bp, 1), jnp.float32),
        in_specs=[vmem] * len(args),
        out_specs=vmem,
    )(*args)
    return out_padded[:B]


# --------------------------- Parameter init --------------------------------- #
def init_params(key, num_features, lstm_nodes):
    """Deterministic synthetic init with shapes matching the PyTorch module."""
    H, F = lstm_nodes, num_features
    keys = jax.random.split(key, 12)

    def kaiming(k, shape, fan_in):
        return jax.random.normal(k, shape, jnp.float32) * jnp.sqrt(2.0 / fan_in)

    params = {
        # LSTM (PyTorch layout: weight_ih (4H,F), weight_hh (4H,H), biases (4H,))
        "w_ih": kaiming(keys[0], (4 * H, F), F),
        "w_hh": kaiming(keys[1], (4 * H, H), H),   # (stand-in for orthogonal init)
        "b_ih": jax.random.uniform(keys[2], (4 * H,), jnp.float32, 0.001, 0.09),
        "b_hh": jax.random.uniform(keys[3], (4 * H,), jnp.float32, 0.001, 0.09),
        # Linear stack
        "w1": kaiming(keys[4], (H, H), H),
        "b1": jax.random.uniform(keys[5], (H,), jnp.float32, 0.1 / 1.0, 0.9 / 1.0),
        "w2": kaiming(keys[6], (H, H), H),
        "b2": jax.random.uniform(keys[7], (H,), jnp.float32, 0.1 / 3.0, 0.9 / 3.0),
        "w3": kaiming(keys[8], (1, H), H),
        "b3": jax.random.uniform(keys[9], (1,), jnp.float32, 0.1 / 5.0, 0.9 / 5.0),
        # BatchNorm1d defaults (fresh module): gamma=1, beta=0, running stats 0/1
        "bn1_gamma": jnp.ones((H,), jnp.float32),
        "bn1_beta": jnp.zeros((H,), jnp.float32),
        "bn1_mean": jnp.zeros((H,), jnp.float32),
        "bn1_var": jnp.ones((H,), jnp.float32),
        "bn2_gamma": jnp.ones((H,), jnp.float32),
        "bn2_beta": jnp.zeros((H,), jnp.float32),
        "bn2_mean": jnp.zeros((H,), jnp.float32),
        "bn2_var": jnp.ones((H,), jnp.float32),
    }
    return params


# --------------------------- Pure-JAX reference ------------------------------ #
def reference_forward(x, params):
    """f32 eval-mode reference matching the PyTorch module semantics."""
    B, T, F = x.shape
    H = params["w_hh"].shape[1]
    b = params["b_ih"] + params["b_hh"]
    h = jnp.zeros((B, H), jnp.float32)
    c = jnp.zeros((B, H), jnp.float32)
    for t in range(T):
        gates = x[:, t, :] @ params["w_ih"].T + h @ params["w_hh"].T + b
        i_g = jax.nn.sigmoid(gates[:, 0 * H:1 * H])
        f_g = jax.nn.sigmoid(gates[:, 1 * H:2 * H])
        g_g = jnp.tanh(gates[:, 2 * H:3 * H])
        o_g = jax.nn.sigmoid(gates[:, 3 * H:4 * H])
        c = f_g * c + i_g * g_g
        h = o_g * jnp.tanh(c)
    eps = 1e-5

    def bn(v, g, bt, m, var):
        return (v - m) * jax.lax.rsqrt(var + eps) * g + bt

    z = h @ params["w1"].T + params["b1"]
    z = jnp.maximum(bn(z, params["bn1_gamma"], params["bn1_beta"],
                       params["bn1_mean"], params["bn1_var"]), 0.0)
    z = z @ params["w2"].T + params["b2"]
    z = jnp.maximum(bn(z, params["bn2_gamma"], params["bn2_beta"],
                       params["bn2_mean"], params["bn2_var"]), 0.0)
    logit = z @ params["w3"].T + params["b3"]
    return jax.nn.sigmoid(logit)


# --------------------------------- Main -------------------------------------- #
if __name__ == "__main__":
    # G.num_features = 8, G.lstm_nodes = 32 (small synthetic config)
    NUM_FEATURES = 8
    LSTM_NODES = 32
    BATCH = 4
    SEQ = 8

    key = jax.random.PRNGKey(0)
    k_x, k_p = jax.random.split(key)

    params = init_params(k_p, NUM_FEATURES, LSTM_NODES)
    x = jax.random.normal(k_x, (BATCH, SEQ, NUM_FEATURES), jnp.float32)

    out = lstm_network_forward(x, params)
    out = jax.block_until_ready(out)

    assert out.shape == (BATCH, 1)
    assert bool(jnp.all(jnp.isfinite(out)))
    assert bool(jnp.all((out >= 0.0) & (out <= 1.0)))   # sigmoid output range

    # Validate bf16-matmul / sigmoid-derived-tanh kernel against the f32 reference.
    ref = reference_forward(x, params)
    max_err = float(jnp.max(jnp.abs(out - ref)))
    assert max_err < 5e-2, f"kernel deviates from f32 reference: max_err={max_err}"

    print("KERNEL_OK")
</pallas_src>

<mosaic_0001>
module attributes {stable_mosaic.version = 11 : i64} {
  func.func @_lstm_mlp_kernel(%arg0: memref<64x8xbf16, #tpu.memory_space<vmem>>, %arg1: memref<8x128xbf16, #tpu.memory_space<vmem>>, %arg2: memref<32x128xbf16, #tpu.memory_space<vmem>>, %arg3: memref<64x32xbf16, #tpu.memory_space<vmem>>, %arg4: memref<8x128xf32, #tpu.memory_space<vmem>>, %arg5: memref<8x1xf32, #tpu.memory_space<vmem>>) attributes {dimension_semantics = [], scalar_prefetch = 0 : i64, scratch_operands = 0 : i64, tpu.core_type = #tpu.core_type<tc>} {
    %c0 = arith.constant 0 : index
    %c0_0 = arith.constant 0 : index
    %0 = vector.load %arg2[%c0, %c0_0] : memref<32x128xbf16, #tpu.memory_space<vmem>>, vector<32x128xbf16>
    %c0_1 = arith.constant 0 : index
    %c0_2 = arith.constant 0 : index
    %1 = vector.load %arg4[%c0_1, %c0_2] : memref<8x128xf32, #tpu.memory_space<vmem>>, vector<1x128xf32>
    %c0_3 = arith.constant 0 : index
    %c0_4 = arith.constant 0 : index
    %2 = vector.load %arg0[%c0_3, %c0_4] : memref<64x8xbf16, #tpu.memory_space<vmem>>, vector<64x8xbf16>
    %c0_5 = arith.constant 0 : index
    %c0_6 = arith.constant 0 : index
    %3 = vector.load %arg1[%c0_5, %c0_6] : memref<8x128xbf16, #tpu.memory_space<vmem>>, vector<8x128xbf16>
    %cst = arith.constant dense<0.000000e+00> : vector<64x128xf32>
    %4 = tpu.matmul %2, %3, %cst {dimension_numbers = #tpu.dot_dimension_numbers<[1], [0], [0], [1], [0, 0, 1, 1], [], []>} : vector<64x8xbf16>, vector<8x128xbf16>, vector<64x128xf32> -> vector<64x128xf32>
    %5 = vector.broadcast %1 : vector<1x128xf32> to vector<64x128xf32>
    %6 = arith.addf %4, %5 : vector<64x128xf32>
    %cst_7 = arith.constant 0.000000e+00 : f32
    %7 = vector.broadcast %cst_7 : f32 to vector<8x32xf32>
    %cst_8 = arith.constant 0.000000e+00 : f32
    %8 = vector.broadcast %cst_8 : f32 to vector<8x32xf32>
    %9 = vector.extract_strided_slice %6 {offsets = [0, 0], sizes = [8, 128], strides = [1, 1]} : vector<64x128xf32> to vector<8x128xf32>
    %10 = arith.truncf %7 : vector<8x32xf32> to vector<8x32xbf16>
    %cst_9 = arith.constant dense<0.000000e+00> : vector<8x128xf32>
    %11 = tpu.matmul %10, %0, %cst_9 {dimension_numbers = #tpu.dot_dimension_numbers<[1], [0], [0], [1], [0, 0, 1, 1], [], []>} : vector<8x32xbf16>, vector<32x128xbf16>, vector<8x128xf32> -> vector<8x128xf32>
    %12 = arith.addf %9, %11 : vector<8x128xf32>
    %13 = arith.negf %12 : vector<8x128xf32>
    %14 = math.exp %13 : vector<8x128xf32>
    %cst_10 = arith.constant 1.000000e+00 : f32
    %15 = vector.broadcast %cst_10 : f32 to vector<8x128xf32>
    %16 = arith.addf %15, %14 : vector<8x128xf32>
    %17 = arith.divf %15, %16 : vector<8x128xf32>
    %18 = vector.extract_strided_slice %17 {offsets = [0, 0], sizes = [8, 32], strides = [1, 1]} : vector<8x128xf32> to vector<8x32xf32>
    %19 = vector.extract_strided_slice %17 {offsets = [0, 32], sizes = [8, 32], strides = [1, 1]} : vector<8x128xf32> to vector<8x32xf32>
    %20 = vector.extract_strided_slice %17 {offsets = [0, 64], sizes = [8, 32], strides = [1, 1]} : vector<8x128xf32> to vector<8x32xf32>
    %cst_11 = arith.constant 2.000000e+00 : f32
    %21 = vector.broadcast %cst_11 : f32 to vector<8x32xf32>
    %22 = arith.mulf %21, %20 : vector<8x32xf32>
    %cst_12 = arith.constant 1.000000e+00 : f32
    %23 = vector.broadcast %cst_12 : f32 to vector<8x32xf32>
    %24 = arith.subf %22, %23 : vector<8x32xf32>
    %25 = vector.extract_strided_slice %17 {offsets = [0, 96], sizes = [8, 32], strides = [1, 1]} : vector<8x128xf32> to vector<8x32xf32>
    %26 = arith.mulf %19, %8 : vector<8x32xf32>
    %27 = arith.mulf %18, %24 : vector<8x32xf32>
    %28 = arith.addf %26, %27 : vector<8x32xf32>
    %29 = math.tanh %28 : vector<8x32xf32>
    %30 = arith.mulf %25, %29 : vector<8x32xf32>
    %31 = vector.extract_strided_slice %6 {offsets = [8, 0], sizes = [8, 128], strides = [1, 1]} : vector<64x128xf32> to vector<8x128xf32>
    %32 = arith.truncf %30 : vector<8x32xf32> to vector<8x32xbf16>
    %cst_13 = arith.constant dense<0.000000e+00> : vector<8x128xf32>
    %33 = tpu.matmul %32, %0, %cst_13 {dimension_numbers = #tpu.dot_dimension_numbers<[1], [0], [0], [1], [0, 0, 1, 1], [], []>} : vector<8x32xbf16>, vector<32x128xbf16>, vector<8x128xf32> -> vector<8x128xf32>
    %34 = arith.addf %31, %33 : vector<8x128xf32>
    %35 = arith.negf %34 : vector<8x128xf32>
    %36 = math.exp %35 : vector<8x128xf32>
    %cst_14 = arith.constant 1.000000e+00 : f32
    %37 = vector.broadcast %cst_14 : f32 to vector<8x128xf32>
    %38 = arith.addf %37, %36 : vector<8x128xf32>
    %39 = arith.divf %37, %38 : vector<8x128xf32>
    %40 = vector.extract_strided_slice %39 {offsets = [0, 0], sizes = [8, 32], strides = [1, 1]} : vector<8x128xf32> to vector<8x32xf32>
    %41 = vector.extract_strided_slice %39 {offsets = [0, 32], sizes = [8, 32], strides = [1, 1]} : vector<8x128xf32> to vector<8x32xf32>
    %42 = vector.extract_strided_slice %39 {offsets = [0, 64], sizes = [8, 32], strides = [1, 1]} : vector<8x128xf32> to vector<8x32xf32>
    %cst_15 = arith.constant 2.000000e+00 : f32
    %43 = vector.broadcast %cst_15 : f32 to vector<8x32xf32>
    %44 = arith.mulf %43, %42 : vector<8x32xf32>
    %cst_16 = arith.constant 1.000000e+00 : f32
    %45 = vector.broadcast %cst_16 : f32 to vector<8x32xf32>
    %46 = arith.subf %44, %45 : vector<8x32xf32>
    %47 = vector.extract_strided_slice %39 {offsets = [0, 96], sizes = [8, 32], strides = [1, 1]} : vector<8x128xf32> to vector<8x32xf32>
    %48 = arith.mulf %41, %28 : vector<8x32xf32>
    %49 = arith.mulf %40, %46 : vector<8x32xf32>
    %50 = arith.addf %48, %49 : vector<8x32xf32>
    %51 = math.tanh %50 : vector<8x32xf32>
    %52 = arith.mulf %47, %51 : vector<8x32xf32>
    %53 = vector.extract_strided_slice %6 {offsets = [16, 0], sizes = [8, 128], strides = [1, 1]} : vector<64x128xf32> to vector<8x128xf32>
    %54 = arith.truncf %52 : vector<8x32xf32> to vector<8x32xbf16>
    %cst_17 = arith.constant dense<0.000000e+00> : vector<8x128xf32>
    %55 = tpu.matmul %54, %0, %cst_17 {dimension_numbers = #tpu.dot_dimension_numbers<[1], [0], [0], [1], [0, 0, 1, 1], [], []>} : vector<8x32xbf16>, vector<32x128xbf16>, vector<8x128xf32> -> vector<8x128xf32>
    %56 = arith.addf %53, %55 : vector<8x128xf32>
    %57 = arith.negf %56 : vector<8x128xf32>
    %58 = math.exp %57 : vector<8x128xf32>
    %cst_18 = arith.constant 1.000000e+00 : f32
    %59 = vector.broadcast %cst_18 : f32 to vector<8x128xf32>
    %60 = arith.addf %59, %58 : vector<8x128xf32>
    %61 = arith.divf %59, %60 : vector<8x128xf32>
    %62 = vector.extract_strided_slice %61 {offsets = [0, 0], sizes = [8, 32], strides = [1, 1]} : vector<8x128xf32> to vector<8x32xf32>
    %63 = vector.extract_strided_slice %61 {offsets = [0, 32], sizes = [8, 32], strides = [1, 1]} : vector<8x128xf32> to vector<8x32xf32>
    %64 = vector.extract_strided_slice %61 {offsets = [0, 64], sizes = [8, 32], strides = [1, 1]} : vector<8x128xf32> to vector<8x32xf32>
    %cst_19 = arith.constant 2.000000e+00 : f32
    %65 = vector.broadcast %cst_19 : f32 to vector<8x32xf32>
    %66 = arith.mulf %65, %64 : vector<8x32xf32>
    %cst_20 = arith.constant 1.000000e+00 : f32
    %67 = vector.broadcast %cst_20 : f32 to vector<8x32xf32>
    %68 = arith.subf %66, %67 : vector<8x32xf32>
    %69 = vector.extract_strided_slice %61 {offsets = [0, 96], sizes = [8, 32], strides = [1, 1]} : vector<8x128xf32> to vector<8x32xf32>
    %70 = arith.mulf %63, %50 : vector<8x32xf32>
    %71 = arith.mulf %62, %68 : vector<8x32xf32>
    %72 = arith.addf %70, %71 : vector<8x32xf32>
    %73 = math.tanh %72 : vector<8x32xf32>
    %74 = arith.mulf %69, %73 : vector<8x32xf32>
    %75 = vector.extract_strided_slice %6 {offsets = [24, 0], sizes = [8, 128], strides = [1, 1]} : vector<64x128xf32> to vector<8x128xf32>
    %76 = arith.truncf %74 : vector<8x32xf32> to vector<8x32xbf16>
    %cst_21 = arith.constant dense<0.000000e+00> : vector<8x128xf32>
    %77 = tpu.matmul %76, %0, %cst_21 {dimension_numbers = #tpu.dot_dimension_numbers<[1], [0], [0], [1], [0, 0, 1, 1], [], []>} : vector<8x32xbf16>, vector<32x128xbf16>, vector<8x128xf32> -> vector<8x128xf32>
    %78 = arith.addf %75, %77 : vector<8x128xf32>
    %79 = arith.negf %78 : vector<8x128xf32>
    %80 = math.exp %79 : vector<8x128xf32>
    %cst_22 = arith.constant 1.000000e+00 : f32
    %81 = vector.broadcast %cst_22 : f32 to vector<8x128xf32>
    %82 = arith.addf %81, %80 : vector<8x128xf32>
    %83 = arith.divf %81, %82 : vector<8x128xf32>
    %84 = vector.extract_strided_slice %83 {offsets = [0, 0], sizes = [8, 32], strides = [1, 1]} : vector<8x128xf32> to vector<8x32xf32>
    %85 = vector.extract_strided_slice %83 {offsets = [0, 32], sizes = [8, 32], strides = [1, 1]} : vector<8x128xf32> to vector<8x32xf32>
    %86 = vector.extract_strided_slice %83 {offsets = [0, 64], sizes = [8, 32], strides = [1, 1]} : vector<8x128xf32> to vector<8x32xf32>
    %cst_23 = arith.constant 2.000000e+00 : f32
    %87 = vector.broadcast %cst_23 : f32 to vector<8x32xf32>
    %88 = arith.mulf %87, %86 : vector<8x32xf32>
    %cst_24 = arith.constant 1.000000e+00 : f32
    %89 = vector.broadcast %cst_24 : f32 to vector<8x32xf32>
    %90 = arith.subf %88, %89 : vector<8x32xf32>
    %91 = vector.extract_strided_slice %83 {offsets = [0, 96], sizes = [8, 32], strides = [1, 1]} : vector<8x128xf32> to vector<8x32xf32>
    %92 = arith.mulf %85, %72 : vector<8x32xf32>
    %93 = arith.mulf %84, %90 : vector<8x32xf32>
    %94 = arith.addf %92, %93 : vector<8x32xf32>
    %95 = math.tanh %94 : vector<8x32xf32>
    %96 = arith.mulf %91, %95 : vector<8x32xf32>
    %97 = vector.extract_strided_slice %6 {offsets = [32, 0], sizes = [8, 128], strides = [1, 1]} : vector<64x128xf32> to vector<8x128xf32>
    %98 = arith.truncf %96 : vector<8x32xf32> to vector<8x32xbf16>
    %cst_25 = arith.constant dense<0.000000e+00> : vector<8x128xf32>
    %99 = tpu.matmul %98, %0, %cst_25 {dimension_numbers = #tpu.dot_dimension_numbers<[1], [0], [0], [1], [0, 0, 1, 1], [], []>} : vector<8x32xbf16>, vector<32x128xbf16>, vector<8x128xf32> -> vector<8x128xf32>
    %100 = arith.addf %97, %99 : vector<8x128xf32>
    %101 = arith.negf %100 : vector<8x128xf32>
    %102 = math.exp %101 : vector<8x128xf32>
    %cst_26 = arith.constant 1.000000e+00 : f32
    %103 = vector.broadcast %cst_26 : f32 to vector<8x128xf32>
    %104 = arith.addf %103, %102 : vector<8x128xf32>
    %105 = arith.divf %103, %104 : vector<8x128xf32>
    %106 = vector.extract_strided_slice %105 {offsets = [0, 0], sizes = [8, 32], strides = [1, 1]} : vector<8x128xf32> to vector<8x32xf32>
    %107 = vector.extract_strided_slice %105 {offsets = [0, 32], sizes = [8, 32], strides = [1, 1]} : vector<8x128xf32> to vector<8x32xf32>
    %108 = vector.extract_strided_slice %105 {offsets = [0, 64], sizes = [8, 32], strides = [1, 1]} : vector<8x128xf32> to vector<8x32xf32>
    %cst_27 = arith.constant 2.000000e+00 : f32
    %109 = vector.broadcast %cst_27 : f32 to vector<8x32xf32>
    %110 = arith.mulf %109, %108 : vector<8x32xf32>
    %cst_28 = arith.constant 1.000000e+00 : f32
    %111 = vector.broadcast %cst_28 : f32 to vector<8x32xf32>
    %112 = arith.subf %110, %111 : vector<8x32xf32>
    %113 = vector.extract_strided_slice %105 {offsets = [0, 96], sizes = [8, 32], strides = [1, 1]} : vector<8x128xf32> to vector<8x32xf32>
    %114 = arith.mulf %107, %94 : vector<8x32xf32>
    %115 = arith.mulf %106, %112 : vector<8x32xf32>
    %116 = arith.addf %114, %115 : vector<8x32xf32>
    %117 = math.tanh %116 : vector<8x32xf32>
    %118 = arith.mulf %113, %117 : vector<8x32xf32>
    %119 = vector.extract_strided_slice %6 {offsets = [40, 0], sizes = [8, 128], strides = [1, 1]} : vector<64x128xf32> to vector<8x128xf32>
    %120 = arith.truncf %118 : vector<8x32xf32> to vector<8x32xbf16>
    %cst_29 = arith.constant dense<0.000000e+00> : vector<8x128xf32>
    %121 = tpu.matmul %120, %0, %cst_29 {dimension_numbers = #tpu.dot_dimension_numbers<[1], [0], [0], [1], [0, 0, 1, 1], [], []>} : vector<8x32xbf16>, vector<32x128xbf16>, vector<8x128xf32> -> vector<8x128xf32>
    %122 = arith.addf %119, %121 : vector<8x128xf32>
    %123 = arith.negf %122 : vector<8x128xf32>
    %124 = math.exp %123 : vector<8x128xf32>
    %cst_30 = arith.constant 1.000000e+00 : f32
    %125 = vector.broadcast %cst_30 : f32 to vector<8x128xf32>
    %126 = arith.addf %125, %124 : vector<8x128xf32>
    %127 = arith.divf %125, %126 : vector<8x128xf32>
    %128 = vector.extract_strided_slice %127 {offsets = [0, 0], sizes = [8, 32], strides = [1, 1]} : vector<8x128xf32> to vector<8x32xf32>
    %129 = vector.extract_strided_slice %127 {offsets = [0, 32], sizes = [8, 32], strides = [1, 1]} : vector<8x128xf32> to vector<8x32xf32>
    %130 = vector.extract_strided_slice %127 {offsets = [0, 64], sizes = [8, 32], strides = [1, 1]} : vector<8x128xf32> to vector<8x32xf32>
    %cst_31 = arith.constant 2.000000e+00 : f32
    %131 = vector.broadcast %cst_31 : f32 to vector<8x32xf32>
    %132 = arith.mulf %131, %130 : vector<8x32xf32>
    %cst_32 = arith.constant 1.000000e+00 : f32
    %133 = vector.broadcast %cst_32 : f32 to vector<8x32xf32>
    %134 = arith.subf %132, %133 : vector<8x32xf32>
    %135 = vector.extract_strided_slice %127 {offsets = [0, 96], sizes = [8, 32], strides = [1, 1]} : vector<8x128xf32> to vector<8x32xf32>
    %136 = arith.mulf %129, %116 : vector<8x32xf32>
    %137 = arith.mulf %128, %134 : vector<8x32xf32>
    %138 = arith.addf %136, %137 : vector<8x32xf32>
    %139 = math.tanh %138 : vector<8x32xf32>
    %140 = arith.mulf %135, %139 : vector<8x32xf32>
    %141 = vector.extract_strided_slice %6 {offsets = [48, 0], sizes = [8, 128], strides = [1, 1]} : vector<64x128xf32> to vector<8x128xf32>
    %142 = arith.truncf %140 : vector<8x32xf32> to vector<8x32xbf16>
    %cst_33 = arith.constant dense<0.000000e+00> : vector<8x128xf32>
    %143 = tpu.matmul %142, %0, %cst_33 {dimension_numbers = #tpu.dot_dimension_numbers<[1], [0], [0], [1], [0, 0, 1, 1], [], []>} : vector<8x32xbf16>, vector<32x128xbf16>, vector<8x128xf32> -> vector<8x128xf32>
    %144 = arith.addf %141, %143 : vector<8x128xf32>
    %145 = arith.negf %144 : vector<8x128xf32>
    %146 = math.exp %145 : vector<8x128xf32>
    %cst_34 = arith.constant 1.000000e+00 : f32
    %147 = vector.broadcast %cst_34 : f32 to vector<8x128xf32>
    %148 = arith.addf %147, %146 : vector<8x128xf32>
    %149 = arith.divf %147, %148 : vector<8x128xf32>
    %150 = vector.extract_strided_slice %149 {offsets = [0, 0], sizes = [8, 32], strides = [1, 1]} : vector<8x128xf32> to vector<8x32xf32>
    %151 = vector.extract_strided_slice %149 {offsets = [0, 32], sizes = [8, 32], strides = [1, 1]} : vector<8x128xf32> to vector<8x32xf32>
    %152 = vector.extract_strided_slice %149 {offsets = [0, 64], sizes = [8, 32], strides = [1, 1]} : vector<8x128xf32> to vector<8x32xf32>
    %cst_35 = arith.constant 2.000000e+00 : f32
    %153 = vector.broadcast %cst_35 : f32 to vector<8x32xf32>
    %154 = arith.mulf %153, %152 : vector<8x32xf32>
    %cst_36 = arith.constant 1.000000e+00 : f32
    %155 = vector.broadcast %cst_36 : f32 to vector<8x32xf32>
    %156 = arith.subf %154, %155 : vector<8x32xf32>
    %157 = vector.extract_strided_slice %149 {offsets = [0, 96], sizes = [8, 32], strides = [1, 1]} : vector<8x128xf32> to vector<8x32xf32>
    %158 = arith.mulf %151, %138 : vector<8x32xf32>
    %159 = arith.mulf %150, %156 : vector<8x32xf32>
    %160 = arith.addf %158, %159 : vector<8x32xf32>
    %161 = math.tanh %160 : vector<8x32xf32>
    %162 = arith.mulf %157, %161 : vector<8x32xf32>
    %163 = vector.extract_strided_slice %6 {offsets = [56, 0], sizes = [8, 128], strides = [1, 1]} : vector<64x128xf32> to vector<8x128xf32>
    %164 = arith.truncf %162 : vector<8x32xf32> to vector<8x32xbf16>
    %cst_37 = arith.constant dense<0.000000e+00> : vector<8x128xf32>
    %165 = tpu.matmul %164, %0, %cst_37 {dimension_numbers = #tpu.dot_dimension_numbers<[1], [0], [0], [1], [0, 0, 1, 1], [], []>} : vector<8x32xbf16>, vector<32x128xbf16>, vector<8x128xf32> -> vector<8x128xf32>
    %166 = arith.addf %163, %165 : vector<8x128xf32>
    %167 = arith.negf %166 : vector<8x128xf32>
    %168 = math.exp %167 : vector<8x128xf32>
    %cst_38 = arith.constant 1.000000e+00 : f32
    %169 = vector.broadcast %cst_38 : f32 to vector<8x128xf32>
    %170 = arith.addf %169, %168 : vector<8x128xf32>
    %171 = arith.divf %169, %170 : vector<8x128xf32>
    %172 = vector.extract_strided_slice %171 {offsets = [0, 0], sizes = [8, 32], strides = [1, 1]} : vector<8x128xf32> to vector<8x32xf32>
    %173 = vector.extract_strided_slice %171 {offsets = [0, 32], sizes = [8, 32], strides = [1, 1]} : vector<8x128xf32> to vector<8x32xf32>
    %174 = vector.extract_strided_slice %171 {offsets = [0, 64], sizes = [8, 32], strides = [1, 1]} : vector<8x128xf32> to vector<8x32xf32>
    %cst_39 = arith.constant 2.000000e+00 : f32
    %175 = vector.broadcast %cst_39 : f32 to vector<8x32xf32>
    %176 = arith.mulf %175, %174 : vector<8x32xf32>
    %cst_40 = arith.constant 1.000000e+00 : f32
    %177 = vector.broadcast %cst_40 : f32 to vector<8x32xf32>
    %178 = arith.subf %176, %177 : vector<8x32xf32>
    %179 = vector.extract_strided_slice %171 {offsets = [0, 96], sizes = [8, 32], strides = [1, 1]} : vector<8x128xf32> to vector<8x32xf32>
    %180 = arith.mulf %173, %160 : vector<8x32xf32>
    %181 = arith.mulf %172, %178 : vector<8x32xf32>
    %182 = arith.addf %180, %181 : vector<8x32xf32>
    %183 = math.tanh %182 : vector<8x32xf32>
    %184 = arith.mulf %179, %183 : vector<8x32xf32>
    %c0_41 = arith.constant 0 : index
    %c0_42 = arith.constant 0 : index
    %185 = vector.load %arg3[%c0_41, %c0_42] : memref<64x32xbf16, #tpu.memory_space<vmem>>, vector<32x32xbf16>
    %c32 = arith.constant 32 : index
    %c0_43 = arith.constant 0 : index
    %186 = vector.load %arg3[%c32, %c0_43] : memref<64x32xbf16, #tpu.memory_space<vmem>>, vector<32x32xbf16>
    %c1 = arith.constant 1 : index
    %c0_44 = arith.constant 0 : index
    %187 = vector.load %arg4[%c1, %c0_44] : memref<8x128xf32, #tpu.memory_space<vmem>>, vector<1x32xf32>
    %c2 = arith.constant 2 : index
    %c0_45 = arith.constant 0 : index
    %188 = vector.load %arg4[%c2, %c0_45] : memref<8x128xf32, #tpu.memory_space<vmem>>, vector<1x32xf32>
    %c3 = arith.constant 3 : index
    %c0_46 = arith.constant 0 : index
    %189 = vector.load %arg4[%c3, %c0_46] : memref<8x128xf32, #tpu.memory_space<vmem>>, vector<1x32xf32>
    %c4 = arith.constant 4 : index
    %c0_47 = arith.constant 0 : index
    %190 = vector.load %arg4[%c4, %c0_47] : memref<8x128xf32, #tpu.memory_space<vmem>>, vector<1x1xf32>
    %191 = arith.truncf %184 : vector<8x32xf32> to vector<8x32xbf16>
    %cst_48 = arith.constant dense<0.000000e+00> : vector<8x32xf32>
    %192 = tpu.matmul %191, %185, %cst_48 {dimension_numbers = #tpu.dot_dimension_numbers<[1], [0], [0], [1], [0, 0, 1, 1], [], []>} : vector<8x32xbf16>, vector<32x32xbf16>, vector<8x32xf32> -> vector<8x32xf32>
    %193 = vector.broadcast %187 : vector<1x32xf32> to vector<8x32xf32>
    %194 = arith.addf %192, %193 : vector<8x32xf32>
    %cst_49 = arith.constant 0.000000e+00 : f32
    %195 = vector.broadcast %cst_49 : f32 to vector<8x32xf32>
    %196 = arith.maximumf %194, %195 : vector<8x32xf32>
    %197 = arith.truncf %196 : vector<8x32xf32> to vector<8x32xbf16>
    %cst_50 = arith.constant dense<0.000000e+00> : vector<8x32xf32>
    %198 = tpu.matmul %197, %186, %cst_50 {dimension_numbers = #tpu.dot_dimension_numbers<[1], [0], [0], [1], [0, 0, 1, 1], [], []>} : vector<8x32xbf16>, vector<32x32xbf16>, vector<8x32xf32> -> vector<8x32xf32>
    %199 = vector.broadcast %188 : vector<1x32xf32> to vector<8x32xf32>
    %200 = arith.addf %198, %199 : vector<8x32xf32>
    %cst_51 = arith.constant 0.000000e+00 : f32
    %201 = vector.broadcast %cst_51 : f32 to vector<8x32xf32>
    %202 = arith.maximumf %200, %201 : vector<8x32xf32>
    %203 = vector.broadcast %189 : vector<1x32xf32> to vector<8x32xf32>
    %204 = arith.mulf %202, %203 : vector<8x32xf32>
    %cst_52 = arith.constant dense<0.000000e+00> : vector<8xf32>
    %205 = vector.multi_reduction <add>, %204, %cst_52 [1] : vector<8x32xf32> to vector<8xf32>
    %206 = vector.shape_cast %205 : vector<8xf32> to vector<8x1xf32>
    %207 = vector.broadcast %190 : vector<1x1xf32> to vector<8x1xf32>
    %208 = arith.addf %206, %207 : vector<8x1xf32>
    %209 = arith.negf %208 : vector<8x1xf32>
    %210 = math.exp %209 : vector<8x1xf32>
    %cst_53 = arith.constant 1.000000e+00 : f32
    %211 = vector.broadcast %cst_53 : f32 to vector<8x1xf32>
    %212 = arith.addf %211, %210 : vector<8x1xf32>
    %213 = arith.divf %211, %212 : vector<8x1xf32>
    %c0_54 = arith.constant 0 : index
    %c0_55 = arith.constant 0 : index
    %214 = vector.load %arg5[%c0_54, %c0_55] : memref<8x1xf32, #tpu.memory_space<vmem>>, vector<8x1xf32>
    tpu.vector_store %arg5[%c0_54, %c0_55], %213 {strides = array<i32>} : memref<8x1xf32, #tpu.memory_space<vmem>>, vector<8x1xf32>,
    return
  }
}

</mosaic_0001>

<llo_original>
// kernel: lstm_network_forward.1
$region0: #{lstm_network_forward.1}
  #allocation0 [shape = 'u32[]', space=smem, size = 0x4, offset = 0x4, fixed_abs, tag = 'smem constant byte address 0x4 - core index']
  #allocation1 [shape = 'u32[144,128]{1,0:T(1,128)}', space=vmem, size = 0x12000, scoped, tag = 'internal scratch']
  %s0 = inlined_call_operand.vmem [shape: bf16[64,8], index: 0, kind: input, shape index: {}]
  %s1 = inlined_call_operand.vmem [shape: bf16[8,128], index: 1, kind: input, shape index: {}]
  %s2 = inlined_call_operand.vmem [shape: bf16[32,128], index: 2, kind: input, shape index: {}]
  %s3 = inlined_call_operand.vmem [shape: bf16[64,32], index: 3, kind: input, shape index: {}]
  %s4 = inlined_call_operand.vmem [shape: f32[8,128], index: 4, kind: input, shape index: {}]
  %s5 = inlined_call_operand.vmem [shape: f32[8,1], index: 5, kind: output, shape index: {}]
  %s6 = sld [smem:[#allocation0]]
  $region30: #{lstm_network_forward.1} parent=0
    _
  %s8 = ssub.s32 1, %s6
  %s9 = scalar_select 0, %s8, %s6
  // Predicated region
  $region2: #{lstm_network_forward.1} parent=0 // pred_check
    _
  $region3: #{lstm_network_forward.1} parent=0 // pred_check_branch
    %11 = sbr.rel (0) target = $region5
  $region4: #{lstm_network_forward.1} parent=0 // pred_region
    _
  $region5: #{lstm_network_forward.1} parent=0 // pred_fallthru
    _
  // Predicated region
  $region6: #{lstm_network_forward.1} parent=0 // pred_check
    _
  $region7: #{lstm_network_forward.1} parent=0 // pred_check_branch
    %13 = sbr.rel (0) target = $region9
  $region8: #{lstm_network_forward.1} parent=0 // pred_region
    _
  $region9: #{lstm_network_forward.1} parent=0 // pred_fallthru
    _
  // Predicated region
  $region10: #{lstm_network_forward.1} parent=0 // pred_check
    _
  $region11: #{lstm_network_forward.1} parent=0 // pred_check_branch
    %15 = sbr.rel (0) target = $region13
  $region12: #{lstm_network_forward.1} parent=0 // pred_region
    _
  $region13: #{lstm_network_forward.1} parent=0 // pred_fallthru
    _
  // Predicated region
  $region14: #{lstm_network_forward.1} parent=0 // pred_check
    _
  $region15: #{lstm_network_forward.1} parent=0 // pred_check_branch
    %17 = sbr.rel (0) target = $region17
  $region16: #{lstm_network_forward.1} parent=0 // pred_region
    _
  $region17: #{lstm_network_forward.1} parent=0 // pred_fallthru
    _
  // Predicated region
  $region18: #{lstm_network_forward.1} parent=0 // pred_check
    _
  $region19: #{lstm_network_forward.1} parent=0 // pred_check_branch
    %19 = sbr.rel (0) target = $region21
  $region20: #{lstm_network_forward.1} parent=0 // pred_region
    _
  $region21: #{lstm_network_forward.1} parent=0 // pred_fallthru
    _
  %v21 = vld [vmem:[%s2] sm:$0xf]
  %v22 = vld [vmem:[%s2 + $0x4] sm:$0xf]
  %v23 = vld [vmem:[%s2 + $0x8] sm:$0xf]
  %v24 = vld [vmem:[%s2 + $0xc] sm:$0xf]
  %v25 = vld [vmem:[%s4] sm:$0x1]
  %v26 = vld [vmem:[%s0] sm:$0xf]
  %v27 = vld [vmem:[%s0 + $0x4] sm:$0xf]
  %v28 = vld [vmem:[%s0 + $0x8] sm:$0xf]
  %v29 = vld [vmem:[%s0 + $0xc] sm:$0xf]
  %v30 = vld [vmem:[%s0 + $0x10] sm:$0xf]
  %v31 = vld [vmem:[%s0 + $0x14] sm:$0xf]
  %v32 = vld [vmem:[%s0 + $0x18] sm:$0xf]
  %v33 = vld [vmem:[%s0 + $0x1c] sm:$0xf]
  %v34 = vld [vmem:[%s1] sm:$0xf]
  %v35 = vlaneseq
  %v36 = vshrl.u32 %v35, 7
  %v37 = vsub.s32 0, %v36
  %v38 = vrot.slane %v25, %v37
  %v47 = vunpack.c.l.b16 %v26
  %v48 = vunpack.c.l.b16 %v27
  %v49 = vunpack.c.l.b16 %v28
  %v50 = vunpack.c.l.b16 %v29
  %v51 = vunpack.c.l.b16 %v30
  %v52 = vunpack.c.l.b16 %v31
  %v53 = vunpack.c.l.b16 %v32
  %v54 = vunpack.c.l.b16 %v33
  %v55 = vpack.c.b16 %v48, %v47
  %v56 = vpack.c.b16 %v50, %v49
  %v57 = vpack.c.b16 %v52, %v51
  %v58 = vpack.c.b16 %v54, %v53
  %vm59 = vcmask 64512
  %v61 = vsel %vm59, %v55, 0
  %v64 = vsel %vm59, %v56, 0
  %v67 = vsel %vm59, %v57, 0
  %v70 = vsel %vm59, %v58, 0
  %vm72 = vcmask 1043456
  %v74 = vsel %vm72, %v34, 0
  %76 = vmatprep.subr.bf16.mxu0 0
  %77 = vmatpush1.bf16.msra.mxu0 %v74
  %78 = vmatprep.subr.bf16.mxu0 0
  %79 = vmatpush1.bf16.msra.mxu0 0
  %80 = vmatprep.subr.bf16.mxu0 0
  %81 = vmatpush1.bf16.msra.mxu0 0
  %82 = vmatprep.subr.bf16.mxu0 0
  %83 = vmatpush1.bf16.msra.mxu0 0
  %84 = vmatprep.subr.bf16.mxu0 0
  %85 = vmatpush1.bf16.msra.mxu0 0
  %86 = vmatprep.subr.bf16.mxu0 0
  %87 = vmatpush1.bf16.msra.mxu0 0
  %88 = vmatprep.subr.bf16.mxu0 0
  %89 = vmatpush1.bf16.msra.mxu0 0
  %90 = vmatprep.subr.bf16.mxu0 0
  %91 = vmatpush1.bf16.msra.mxu0 0
  %92 = vmatprep.subr.bf16.mxu0 0
  %93 = vmatpush1.bf16.msra.mxu0 0
  %94 = vmatprep.subr.bf16.mxu0 0
  %95 = vmatpush1.bf16.msra.mxu0 0
  %96 = vmatprep.subr.bf16.mxu0 0
  %97 = vmatpush1.bf16.msra.mxu0 0
  %98 = vmatprep.subr.bf16.mxu0 0
  %99 = vmatpush1.bf16.msra.mxu0 0
  %100 = vmatprep.subr.bf16.mxu0 0
  %101 = vmatpush1.bf16.msra.mxu0 0
  %102 = vmatprep.subr.bf16.mxu0 0
  %103 = vmatpush1.bf16.msra.mxu0 0
  %104 = vmatprep.subr.bf16.mxu0 0
  %105 = vmatpush1.bf16.msra.mxu0 0
  %106 = vmatprep.subr.bf16.mxu0 0
  %107 = vmatpush1.bf16.msra.mxu0 0
  %108 = vmatprep.mubr.bf16.mxu0 0
  %109 = vmatmul.mubr.bf16.gmra.mrb[0].mxu0 %v61
  %v110 = vpop.f32.mrb[0].mxu0
  %v111 = vadd.f32 %v38, %v110
  %v112 = vpop.f32.mrb[0].mxu0
  %v113 = vpop.f32.mrb[0].mxu0
  %v114 = vadd.f32 %v38, %v113
  %v115 = vpop.f32.mrb[0].mxu0
  %116 = vmatprep.mubr.bf16.mxu0 0
  %117 = vmatmul.mubr.bf16.gmra.mrb[0].mxu0 %v64
  %v118 = vpop.f32.mrb[0].mxu0
  %v119 = vadd.f32 %v38, %v118
  %v120 = vpop.f32.mrb[0].mxu0
  %v121 = vpop.f32.mrb[0].mxu0
  %v122 = vadd.f32 %v38, %v121
  %v123 = vpop.f32.mrb[0].mxu0
  %124 = vmatprep.mubr.bf16.mxu0 0
  %125 = vmatmul.mubr.bf16.gmra.mrb[0].mxu0 %v67
  %v126 = vpop.f32.mrb[0].mxu0
  %v127 = vadd.f32 %v38, %v126
  %v128 = vpop.f32.mrb[0].mxu0
  %v129 = vpop.f32.mrb[0].mxu0
  %v130 = vadd.f32 %v38, %v129
  %v131 = vpop.f32.mrb[0].mxu0
  %132 = vmatprep.mubr.bf16.mxu0 0
  %133 = vmatmul.mubr.bf16.gmra.mrb[0].mxu0 %v70
  %v134 = vpop.f32.mrb[0].mxu0
  %v135 = vadd.f32 %v38, %v134
  %v136 = vpop.f32.mrb[0].mxu0
  %v137 = vpop.f32.mrb[0].mxu0
  %v138 = vadd.f32 %v38, %v137
  %v139 = vpop.f32.mrb[0].mxu0
  %140 = vdwg.mxu0
  %v145 = vunpack.c.l.b16 %v21
  %v146 = vunpack.c.l.b16 %v22
  %v147 = vunpack.c.l.b16 %v23
  %v148 = vunpack.c.l.b16 %v24
  %v149 = vpack.c.b16 %v146, %v145
  %v150 = vpack.c.b16 %v148, %v147
  %vm153 = vcmask 261120
  %v155 = vsel %vm153, 0, 0
  %157 = vmatprep.subr.bf16.mxu0 0
  %158 = vmatpush1.bf16.msra.mxu0 %v149
  %159 = vmatprep.subr.bf16.mxu0 0
  %160 = vmatpush1.bf16.msra.mxu0 %v150
  %161 = vmatprep.subr.bf16.mxu0 0
  %162 = vmatpush1.bf16.msra.mxu0 0
  %163 = vmatprep.subr.bf16.mxu0 0
  %164 = vmatpush1.bf16.msra.mxu0 0
  %165 = vmatprep.subr.bf16.mxu0 0
  %166 = vmatpush1.bf16.msra.mxu0 0
  %167 = vmatprep.subr.bf16.mxu0 0
  %168 = vmatpush1.bf16.msra.mxu0 0
  %169 = vmatprep.subr.bf16.mxu0 0
  %170 = vmatpush1.bf16.msra.mxu0 0
  %171 = vmatprep.subr.bf16.mxu0 0
  %172 = vmatpush1.bf16.msra.mxu0 0
  %173 = vmatprep.subr.bf16.mxu0 0
  %174 = vmatpush1.bf16.msra.mxu0 0
  %175 = vmatprep.subr.bf16.mxu0 0
  %176 = vmatpush1.bf16.msra.mxu0 0
  %177 = vmatprep.subr.bf16.mxu0 0
  %178 = vmatpush1.bf16.msra.mxu0 0
  %179 = vmatprep.subr.bf16.mxu0 0
  %180 = vmatpush1.bf16.msra.mxu0 0
  %181 = vmatprep.subr.bf16.mxu0 0
  %182 = vmatpush1.bf16.msra.mxu0 0
  %183 = vmatprep.subr.bf16.mxu0 0
  %184 = vmatpush1.bf16.msra.mxu0 0
  %185 = vmatprep.subr.bf16.mxu0 0
  %186 = vmatpush1.bf16.msra.mxu0 0
  %187 = vmatprep.subr.bf16.mxu0 0
  %188 = vmatpush1.bf16.msra.mxu0 0
  %189 = vmatprep.mubr.bf16.mxu0 0
  %190 = vmatmul.mubr.bf16.gmra.mrb[0].mxu0 %v155
  %v191 = vpop.f32.mrb[0].mxu0
  %v192 = vadd.f32 0.0, %v191
  %v193 = vpop.f32.mrb[0].mxu0
  %v194 = vpop.f32.mrb[0].mxu0
  %v195 = vpop.f32.mrb[0].mxu0
  %196 = vdwg.mxu0
  %v197 = vadd.f32 %v111, %v192
  %v198 = vxor.u32 %v197, 2147483648
  %v199 = vmul.f32 %v198, 1.442695
  %v200 = vpow.pop %v199
  %v201 = vadd.f32 %v200, 1.0
  %v202 = vrcp.pop %v201
  %v203 = vmul.f32 1.0, %v202
  %v204 = vmul.f32 %v203, 2.0
  %v205 = vsub.f32 %v204, 1.0
  %v206 = vmul.f32 %v203, 0.0
  %208 = vrot.lane.b32.xlu0 %v205, 64
  %v209 = vpop.permute.xlu0 %208
  %v211 = vmul.f32 %v203, %v209
  %213 = vrot.lane.b32.xlu0 %v211, 32
  %v214 = vpop.permute.xlu0 %213
  %v216 = vadd.f32 %v206, %v214
  %v217 = vtanh.pop %v216
  %219 = vrot.lane.b32.xlu0 %v217, 64
  %v220 = vpop.permute.xlu0 %219
  %v222 = vmul.f32 %v203, %v220
  %v223 = vpack.c.bf16 %v222, %v222
  %225 = vrot.lane.b32.xlu0 %v223, 32
  %v226 = vpop.permute.xlu0 %225
  %v228 = vsel %vm153, %v226, 0
  %230 = vmatprep.subr.bf16.mxu0 0
  %231 = vmatpush1.bf16.msra.mxu0 %v149
  %232 = vmatprep.subr.bf16.mxu0 0
  %233 = vmatpush1.bf16.msra.mxu0 %v150
  %234 = vmatprep.subr.bf16.mxu0 0
  %235 = vmatpush1.bf16.msra.mxu0 0
  %236 = vmatprep.subr.bf16.mxu0 0
  %237 = vmatpush1.bf16.msra.mxu0 0
  %238 = vmatprep.subr.bf16.mxu0 0
  %239 = vmatpush1.bf16.msra.mxu0 0
  %240 = vmatprep.subr.bf16.mxu0 0
  %241 = vmatpush1.bf16.msra.mxu0 0
  %242 = vmatprep.subr.bf16.mxu0 0
  %243 = vmatpush1.bf16.msra.mxu0 0
  %244 = vmatprep.subr.bf16.mxu0 0
  %245 = vmatpush1.bf16.msra.mxu0 0
  %246 = vmatprep.subr.bf16.mxu0 0
  %247 = vmatpush1.bf16.msra.mxu0 0
  %248 = vmatprep.subr.bf16.mxu0 0
  %249 = vmatpush1.bf16.msra.mxu0 0
  %250 = vmatprep.subr.bf16.mxu0 0
  %251 = vmatpush1.bf16.msra.mxu0 0
  %252 = vmatprep.subr.bf16.mxu0 0
  %253 = vmatpush1.bf16.msra.mxu0 0
  %254 = vmatprep.subr.bf16.mxu0 0
  %255 = vmatpush1.bf16.msra.mxu0 0
  %256 = vmatprep.subr.bf16.mxu0 0
  %257 = vmatpush1.bf16.msra.mxu0 0
  %258 = vmatprep.subr.bf16.mxu0 0
  %259 = vmatpush1.bf16.msra.mxu0 0
  %260 = vmatprep.subr.bf16.mxu0 0
  %261 = vmatpush1.bf16.msra.mxu0 0
  %262 = vmatprep.mubr.bf16.mxu0 0
  %263 = vmatmul.mubr.bf16.gmra.mrb[0].mxu0 %v228
  %v264 = vpop.f32.mrb[0].mxu0
  %v265 = vadd.f32 0.0, %v264
  %v266 = vpop.f32.mrb[0].mxu0
  %v267 = vpop.f32.mrb[0].mxu0
  %v268 = vpop.f32.mrb[0].mxu0
  %269 = vdwg.mxu0
  %v270 = vadd.f32 %v114, %v265
  %v271 = vxor.u32 %v270, 2147483648
  %v272 = vmul.f32 %v271, 1.442695
  %v273 = vpow.pop %v272
  %v274 = vadd.f32 %v273, 1.0
  %v275 = vrcp.pop %v274
  %v276 = vmul.f32 1.0, %v275
  %v277 = vmul.f32 %v276, 2.0
  %v278 = vsub.f32 %v277, 1.0
  %v279 = vmul.f32 %v276, %v216
  %281 = vrot.lane.b32.xlu0 %v278, 64
  %v282 = vpop.permute.xlu0 %281
  %v284 = vmul.f32 %v276, %v282
  %286 = vrot.lane.b32.xlu0 %v284, 32
  %v287 = vpop.permute.xlu0 %286
  %v289 = vadd.f32 %v279, %v287
  %v290 = vtanh.pop %v289
  %292 = vrot.lane.b32.xlu0 %v290, 64
  %v293 = vpop.permute.xlu0 %292
  %v295 = vmul.f32 %v276, %v293
  %v296 = vpack.c.bf16 %v295, %v295
  %298 = vrot.lane.b32.xlu0 %v296, 32
  %v299 = vpop.permute.xlu0 %298
  %v301 = vsel %vm153, %v299, 0
  %303 = vmatprep.subr.bf16.mxu0 0
  %304 = vmatpush1.bf16.msra.mxu0 %v149
  %305 = vmatprep.subr.bf16.mxu0 0
  %306 = vmatpush1.bf16.msra.mxu0 %v150
  %307 = vmatprep.subr.bf16.mxu0 0
  %308 = vmatpush1.bf16.msra.mxu0 0
  %309 = vmatprep.subr.bf16.mxu0 0
  %310 = vmatpush1.bf16.msra.mxu0 0
  %311 = vmatprep.subr.bf16.mxu0 0
  %312 = vmatpush1.bf16.msra.mxu0 0
  %313 = vmatprep.subr.bf16.mxu0 0
  %314 = vmatpush1.bf16.msra.mxu0 0
  %315 = vmatprep.subr.bf16.mxu0 0
  %316 = vmatpush1.bf16.msra.mxu0 0
  %317 = vmatprep.subr.bf16.mxu0 0
  %318 = vmatpush1.bf16.msra.mxu0 0
  %319 = vmatprep.subr.bf16.mxu0 0
  %320 = vmatpush1.bf16.msra.mxu0 0
  %321 = vmatprep.subr.bf16.mxu0 0
  %322 = vmatpush1.bf16.msra.mxu0 0
  %323 = vmatprep.subr.bf16.mxu0 0
  %324 = vmatpush1.bf16.msra.mxu0 0
  %325 = vmatprep.subr.bf16.mxu0 0
  %326 = vmatpush1.bf16.msra.mxu0 0
  %327 = vmatprep.subr.bf16.mxu0 0
  %328 = vmatpush1.bf16.msra.mxu0 0
  %329 = vmatprep.subr.bf16.mxu0 0
  %330 = vmatpush1.bf16.msra.mxu0 0
  %331 = vmatprep.subr.bf16.mxu0 0
  %332 = vmatpush1.bf16.msra.mxu0 0
  %333 = vmatprep.subr.bf16.mxu0 0
  %334 = vmatpush1.bf16.msra.mxu0 0
  %335 = vmatprep.mubr.bf16.mxu0 0
  %336 = vmatmul.mubr.bf16.gmra.mrb[0].mxu0 %v301
  %v337 = vpop.f32.mrb[0].mxu0
  %v338 = vadd.f32 0.0, %v337
  %v339 = vpop.f32.mrb[0].mxu0
  %v340 = vpop.f32.mrb[0].mxu0
  %v341 = vpop.f32.mrb[0].mxu0
  %342 = vdwg.mxu0
  %v343 = vadd.f32 %v119, %v338
  %v344 = vxor.u32 %v343, 2147483648
  %v345 = vmul.f32 %v344, 1.442695
  %v346 = vpow.pop %v345
  %v347 = vadd.f32 %v346, 1.0
  %v348 = vrcp.pop %v347
  %v349 = vmul.f32 1.0, %v348
  %v350 = vmul.f32 %v349, 2.0
  %v351 = vsub.f32 %v350, 1.0
  %v352 = vmul.f32 %v349, %v289
  %354 = vrot.lane.b32.xlu0 %v351, 64
  %v355 = vpop.permute.xlu0 %354
  %v357 = vmul.f32 %v349, %v355
  %359 = vrot.lane.b32.xlu0 %v357, 32
  %v360 = vpop.permute.xlu0 %359
  %v362 = vadd.f32 %v352, %v360
  %v363 = vtanh.pop %v362
  %365 = vrot.lane.b32.xlu0 %v363, 64
  %v366 = vpop.permute.xlu0 %365
  %v368 = vmul.f32 %v349, %v366
  %v369 = vpack.c.bf16 %v368, %v368
  %371 = vrot.lane.b32.xlu0 %v369, 32
  %v372 = vpop.permute.xlu0 %371
  %v374 = vsel %vm153, %v372, 0
  %376 = vmatprep.subr.bf16.mxu0 0
  %377 = vmatpush1.bf16.msra.mxu0 %v149
  %378 = vmatprep.subr.bf16.mxu0 0
  %379 = vmatpush1.bf16.msra.mxu0 %v150
  %380 = vmatprep.subr.bf16.mxu0 0
  %381 = vmatpush1.bf16.msra.mxu0 0
  %382 = vmatprep.subr.bf16.mxu0 0
  %383 = vmatpush1.bf16.msra.mxu0 0
  %384 = vmatprep.subr.bf16.mxu0 0
  %385 = vmatpush1.bf16.msra.mxu0 0
  %386 = vmatprep.subr.bf16.mxu0 0
  %387 = vmatpush1.bf16.msra.mxu0 0
  %388 = vmatprep.subr.bf16.mxu0 0
  %389 = vmatpush1.bf16.msra.mxu0 0
  %390 = vmatprep.subr.bf16.mxu0 0
  %391 = vmatpush1.bf16.msra.mxu0 0
  %392 = vmatprep.subr.bf16.mxu0 0
  %393 = vmatpush1.bf16.msra.mxu0 0
  %394 = vmatprep.subr.bf16.mxu0 0
  %395 = vmatpush1.bf16.msra.mxu0 0
  %396 = vmatprep.subr.bf16.mxu0 0
  %397 = vmatpush1.bf16.msra.mxu0 0
  %398 = vmatprep.subr.bf16.mxu0 0
  %399 = vmatpush1.bf16.msra.mxu0 0
  %400 = vmatprep.subr.bf16.mxu0 0
  %401 = vmatpush1.bf16.msra.mxu0 0
  %402 = vmatprep.subr.bf16.mxu0 0
  %403 = vmatpush1.bf16.msra.mxu0 0
  %404 = vmatprep.subr.bf16.mxu0 0
  %405 = vmatpush1.bf16.msra.mxu0 0
  %406 = vmatprep.subr.bf16.mxu0 0
  %407 = vmatpush1.bf16.msra.mxu0 0
  %408 = vmatprep.mubr.bf16.mxu0 0
  %409 = vmatmul.mubr.bf16.gmra.mrb[0].mxu0 %v374
  %v410 = vpop.f32.mrb[0].mxu0
  %v411 = vadd.f32 0.0, %v410
  %v412 = vpop.f32.mrb[0].mxu0
  %v413 = vpop.f32.mrb[0].mxu0
  %v414 = vpop.f32.mrb[0].mxu0
  %415 = vdwg.mxu0
  %v416 = vadd.f32 %v122, %v411
  %v417 = vxor.u32 %v416, 2147483648
  %v418 = vmul.f32 %v417, 1.442695
  %v419 = vpow.pop %v418
  %v420 = vadd.f32 %v419, 1.0
  %v421 = vrcp.pop %v420
  %v422 = vmul.f32 1.0, %v421
  %v423 = vmul.f32 %v422, 2.0
  %v424 = vsub.f32 %v423, 1.0
  %v425 = vmul.f32 %v422, %v362
  %427 = vrot.lane.b32.xlu0 %v424, 64
  %v428 = vpop.permute.xlu0 %427
  %v430 = vmul.f32 %v422, %v428
  %432 = vrot.lane.b32.xlu0 %v430, 32
  %v433 = vpop.permute.xlu0 %432
  %v435 = vadd.f32 %v425, %v433
  %v436 = vtanh.pop %v435
  %438 = vrot.lane.b32.xlu0 %v436, 64
  %v439 = vpop.permute.xlu0 %438
  %v441 = vmul.f32 %v422, %v439
  %v442 = vpack.c.bf16 %v441, %v441
  %444 = vrot.lane.b32.xlu0 %v442, 32
  %v445 = vpop.permute.xlu0 %444
  %v447 = vsel %vm153, %v445, 0
  %449 = vmatprep.subr.bf16.mxu0 0
  %450 = vmatpush1.bf16.msra.mxu0 %v149
  %451 = vmatprep.subr.bf16.mxu0 0
  %452 = vmatpush1.bf16.msra.mxu0 %v150
  %453 = vmatprep.subr.bf16.mxu0 0
  %454 = vmatpush1.bf16.msra.mxu0 0
  %455 = vmatprep.subr.bf16.mxu0 0
  %456 = vmatpush1.bf16.msra.mxu0 0
  %457 = vmatprep.subr.bf16.mxu0 0
  %458 = vmatpush1.bf16.msra.mxu0 0
  %459 = vmatprep.subr.bf16.mxu0 0
  %460 = vmatpush1.bf16.msra.mxu0 0
  %461 = vmatprep.subr.bf16.mxu0 0
  %462 = vmatpush1.bf16.msra.mxu0 0
  %463 = vmatprep.subr.bf16.mxu0 0
  %464 = vmatpush1.bf16.msra.mxu0 0
  %465 = vmatprep.subr.bf16.mxu0 0
  %466 = vmatpush1.bf16.msra.mxu0 0
  %467 = vmatprep.subr.bf16.mxu0 0
  %468 = vmatpush1.bf16.msra.mxu0 0
  %469 = vmatprep.subr.bf16.mxu0 0
  %470 = vmatpush1.bf16.msra.mxu0 0
  %471 = vmatprep.subr.bf16.mxu0 0
  %472 = vmatpush1.bf16.msra.mxu0 0
  %473 = vmatprep.subr.bf16.mxu0 0
  %474 = vmatpush1.bf16.msra.mxu0 0
  %475 = vmatprep.subr.bf16.mxu0 0
  %476 = vmatpush1.bf16.msra.mxu0 0
  %477 = vmatprep.subr.bf16.mxu0 0
  %478 = vmatpush1.bf16.msra.mxu0 0
  %479 = vmatprep.subr.bf16.mxu0 0
  %480 = vmatpush1.bf16.msra.mxu0 0
  %481 = vmatprep.mubr.bf16.mxu0 0
  %482 = vmatmul.mubr.bf16.gmra.mrb[0].mxu0 %v447
  %v483 = vpop.f32.mrb[0].mxu0
  %v484 = vadd.f32 0.0, %v483
  %v485 = vpop.f32.mrb[0].mxu0
  %v486 = vpop.f32.mrb[0].mxu0
  %v487 = vpop.f32.mrb[0].mxu0
  %488 = vdwg.mxu0
  %v489 = vadd.f32 %v127, %v484
  %v490 = vxor.u32 %v489, 2147483648
  %v491 = vmul.f32 %v490, 1.442695
  %v492 = vpow.pop %v491
  %v493 = vadd.f32 %v492, 1.0
  %v494 = vrcp.pop %v493
  %v495 = vmul.f32 1.0, %v494
  %v496 = vmul.f32 %v495, 2.0
  %v497 = vsub.f32 %v496, 1.0
  %v498 = vmul.f32 %v495, %v435
  %500 = vrot.lane.b32.xlu0 %v497, 64
  %v501 = vpop.permute.xlu0 %500
  %v503 = vmul.f32 %v495, %v501
  %505 = vrot.lane.b32.xlu0 %v503, 32
  %v506 = vpop.permute.xlu0 %505
  %v508 = vadd.f32 %v498, %v506
  %v509 = vtanh.pop %v508
  %511 = vrot.lane.b32.xlu0 %v509, 64
  %v512 = vpop.permute.xlu0 %511
  %v514 = vmul.f32 %v495, %v512
  %v515 = vpack.c.bf16 %v514, %v514
  %517 = vrot.lane.b32.xlu0 %v515, 32
  %v518 = vpop.permute.xlu0 %517
  %v520 = vsel %vm153, %v518, 0
  %522 = vmatprep.subr.bf16.mxu0 0
  %523 = vmatpush1.bf16.msra.mxu0 %v149
  %524 = vmatprep.subr.bf16.mxu0 0
  %525 = vmatpush1.bf16.msra.mxu0 %v150
  %526 = vmatprep.subr.bf16.mxu0 0
  %527 = vmatpush1.bf16.msra.mxu0 0
  %528 = vmatprep.subr.bf16.mxu0 0
  %529 = vmatpush1.bf16.msra.mxu0 0
  %530 = vmatprep.subr.bf16.mxu0 0
  %531 = vmatpush1.bf16.msra.mxu0 0
  %532 = vmatprep.subr.bf16.mxu0 0
  %533 = vmatpush1.bf16.msra.mxu0 0
  %534 = vmatprep.subr.bf16.mxu0 0
  %535 = vmatpush1.bf16.msra.mxu0 0
  %536 = vmatprep.subr.bf16.mxu0 0
  %537 = vmatpush1.bf16.msra.mxu0 0
  %538 = vmatprep.subr.bf16.mxu0 0
  %539 = vmatpush1.bf16.msra.mxu0 0
  %540 = vmatprep.subr.bf16.mxu0 0
  %541 = vmatpush1.bf16.msra.mxu0 0
  %542 = vmatprep.subr.bf16.mxu0 0
  %543 = vmatpush1.bf16.msra.mxu0 0
  %544 = vmatprep.subr.bf16.mxu0 0
  %545 = vmatpush1.bf16.msra.mxu0 0
  %546 = vmatprep.subr.bf16.mxu0 0
  %547 = vmatpush1.bf16.msra.mxu0 0
  %548 = vmatprep.subr.bf16.mxu0 0
  %549 = vmatpush1.bf16.msra.mxu0 0
  %550 = vmatprep.subr.bf16.mxu0 0
  %551 = vmatpush1.bf16.msra.mxu0 0
  %552 = vmatprep.subr.bf16.mxu0 0
  %553 = vmatpush1.bf16.msra.mxu0 0
  %554 = vmatprep.mubr.bf16.mxu0 0
  %555 = vmatmul.mubr.bf16.gmra.mrb[0].mxu0 %v520
  %v556 = vpop.f32.mrb[0].mxu0
  %v557 = vadd.f32 0.0, %v556
  %v558 = vpop.f32.mrb[0].mxu0
  %v559 = vpop.f32.mrb[0].mxu0
  %v560 = vpop.f32.mrb[0].mxu0
  %561 = vdwg.mxu0
  %v562 = vadd.f32 %v130, %v557
  %v563 = vxor.u32 %v562, 2147483648
  %v564 = vmul.f32 %v563, 1.442695
  %v565 = vpow.pop %v564
  %v566 = vadd.f32 %v565, 1.0
  %v567 = vrcp.pop %v566
  %v568 = vmul.f32 1.0, %v567
  %v569 = vmul.f32 %v568, 2.0
  %v570 = vsub.f32 %v569, 1.0
  %v571 = vmul.f32 %v568, %v508
  %573 = vrot.lane.b32.xlu0 %v570, 64
  %v574 = vpop.permute.xlu0 %573
  %v576 = vmul.f32 %v568, %v574
  %578 = vrot.lane.b32.xlu0 %v576, 32
  %v579 = vpop.permute.xlu0 %578
  %v581 = vadd.f32 %v571, %v579
  %v582 = vtanh.pop %v581
  %584 = vrot.lane.b32.xlu0 %v582, 64
  %v585 = vpop.permute.xlu0 %584
  %v587 = vmul.f32 %v568, %v585
  %v588 = vpack.c.bf16 %v587, %v587
  %590 = vrot.lane.b32.xlu0 %v588, 32
  %v591 = vpop.permute.xlu0 %590
  %v593 = vsel %vm153, %v591, 0
  %595 = vmatprep.subr.bf16.mxu0 0
  %596 = vmatpush1.bf16.msra.mxu0 %v149
  %597 = vmatprep.subr.bf16.mxu0 0
  %598 = vmatpush1.bf16.msra.mxu0 %v150
  %599 = vmatprep.subr.bf16.mxu0 0
  %600 = vmatpush1.bf16.msra.mxu0 0
  %601 = vmatprep.subr.bf16.mxu0 0
  %602 = vmatpush1.bf16.msra.mxu0 0
  %603 = vmatprep.subr.bf16.mxu0 0
  %604 = vmatpush1.bf16.msra.mxu0 0
  %605 = vmatprep.subr.bf16.mxu0 0
  %606 = vmatpush1.bf16.msra.mxu0 0
  %607 = vmatprep.subr.bf16.mxu0 0
  %608 = vmatpush1.bf16.msra.mxu0 0
  %609 = vmatprep.subr.bf16.mxu0 0
  %610 = vmatpush1.bf16.msra.mxu0 0
  %611 = vmatprep.subr.bf16.mxu0 0
  %612 = vmatpush1.bf16.msra.mxu0 0
  %613 = vmatprep.subr.bf16.mxu0 0
  %614 = vmatpush1.bf16.msra.mxu0 0
  %615 = vmatprep.subr.bf16.mxu0 0
  %616 = vmatpush1.bf16.msra.mxu0 0
  %617 = vmatprep.subr.bf16.mxu0 0
  %618 = vmatpush1.bf16.msra.mxu0 0
  %619 = vmatprep.subr.bf16.mxu0 0
  %620 = vmatpush1.bf16.msra.mxu0 0
  %621 = vmatprep.subr.bf16.mxu0 0
  %622 = vmatpush1.bf16.msra.mxu0 0
  %623 = vmatprep.subr.bf16.mxu0 0
  %624 = vmatpush1.bf16.msra.mxu0 0
  %625 = vmatprep.subr.bf16.mxu0 0
  %626 = vmatpush1.bf16.msra.mxu0 0
  %627 = vmatprep.mubr.bf16.mxu0 0
  %628 = vmatmul.mubr.bf16.gmra.mrb[0].mxu0 %v593
  %v629 = vpop.f32.mrb[0].mxu0
  %v630 = vadd.f32 0.0, %v629
  %v631 = vpop.f32.mrb[0].mxu0
  %v632 = vpop.f32.mrb[0].mxu0
  %v633 = vpop.f32.mrb[0].mxu0
  %634 = vdwg.mxu0
  %v635 = vadd.f32 %v135, %v630
  %v636 = vxor.u32 %v635, 2147483648
  %v637 = vmul.f32 %v636, 1.442695
  %v638 = vpow.pop %v637
  %v639 = vadd.f32 %v638, 1.0
  %v640 = vrcp.pop %v639
  %v641 = vmul.f32 1.0, %v640
  %v642 = vmul.f32 %v641, 2.0
  %v643 = vsub.f32 %v642, 1.0
  %v644 = vmul.f32 %v641, %v581
  %646 = vrot.lane.b32.xlu0 %v643, 64
  %v647 = vpop.permute.xlu0 %646
  %v649 = vmul.f32 %v641, %v647
  %651 = vrot.lane.b32.xlu0 %v649, 32
  %v652 = vpop.permute.xlu0 %651
  %v654 = vadd.f32 %v644, %v652
  %v655 = vtanh.pop %v654
  %657 = vrot.lane.b32.xlu0 %v655, 64
  %v658 = vpop.permute.xlu0 %657
  %v660 = vmul.f32 %v641, %v658
  %v661 = vpack.c.bf16 %v660, %v660
  %663 = vrot.lane.b32.xlu0 %v661, 32
  %v664 = vpop.permute.xlu0 %663
  %v666 = vsel %vm153, %v664, 0
  %668 = vmatprep.subr.bf16.mxu0 0
  %669 = vmatpush1.bf16.msra.mxu0 %v149
  %670 = vmatprep.subr.bf16.mxu0 0
  %671 = vmatpush1.bf16.msra.mxu0 %v150
  %672 = vmatprep.subr.bf16.mxu0 0
  %673 = vmatpush1.bf16.msra.mxu0 0
  %674 = vmatprep.subr.bf16.mxu0 0
  %675 = vmatpush1.bf16.msra.mxu0 0
  %676 = vmatprep.subr.bf16.mxu0 0
  %677 = vmatpush1.bf16.msra.mxu0 0
  %678 = vmatprep.subr.bf16.mxu0 0
  %679 = vmatpush1.bf16.msra.mxu0 0
  %680 = vmatprep.subr.bf16.mxu0 0
  %681 = vmatpush1.bf16.msra.mxu0 0
  %682 = vmatprep.subr.bf16.mxu0 0
  %683 = vmatpush1.bf16.msra.mxu0 0
  %684 = vmatprep.subr.bf16.mxu0 0
  %685 = vmatpush1.bf16.msra.mxu0 0
  %686 = vmatprep.subr.bf16.mxu0 0
  %687 = vmatpush1.bf16.msra.mxu0 0
  %688 = vmatprep.subr.bf16.mxu0 0
  %689 = vmatpush1.bf16.msra.mxu0 0
  %690 = vmatprep.subr.bf16.mxu0 0
  %691 = vmatpush1.bf16.msra.mxu0 0
  %692 = vmatprep.subr.bf16.mxu0 0
  %693 = vmatpush1.bf16.msra.mxu0 0
  %694 = vmatprep.subr.bf16.mxu0 0
  %695 = vmatpush1.bf16.msra.mxu0 0
  %696 = vmatprep.subr.bf16.mxu0 0
  %697 = vmatpush1.bf16.msra.mxu0 0
  %698 = vmatprep.subr.bf16.mxu0 0
  %699 = vmatpush1.bf16.msra.mxu0 0
  %700 = vmatprep.mubr.bf16.mxu0 0
  %701 = vmatmul.mubr.bf16.gmra.mrb[0].mxu0 %v666
  %v702 = vpop.f32.mrb[0].mxu0
  %v703 = vadd.f32 0.0, %v702
  %v704 = vpop.f32.mrb[0].mxu0
  %v705 = vpop.f32.mrb[0].mxu0
  %v706 = vpop.f32.mrb[0].mxu0
  %707 = vdwg.mxu0
  %v708 = vadd.f32 %v138, %v703
  %v709 = vxor.u32 %v708, 2147483648
  %v710 = vmul.f32 %v709, 1.442695
  %v711 = vpow.pop %v710
  %v712 = vadd.f32 %v711, 1.0
  %v713 = vrcp.pop %v712
  %v714 = vmul.f32 1.0, %v713
  %v715 = vmul.f32 %v714, 2.0
  %v716 = vsub.f32 %v715, 1.0
  %v717 = vmul.f32 %v714, %v654
  %719 = vrot.lane.b32.xlu0 %v716, 64
  %v720 = vpop.permute.xlu0 %719
  %v722 = vmul.f32 %v714, %v720
  %724 = vrot.lane.b32.xlu0 %v722, 32
  %v725 = vpop.permute.xlu0 %724
  %v727 = vadd.f32 %v717, %v725
  %v728 = vtanh.pop %v727
  %730 = vrot.lane.b32.xlu0 %v728, 64
  %v731 = vpop.permute.xlu0 %730
  %v733 = vmul.f32 %v714, %v731
  %v734 = vld [vmem:[%s3] sm:$0xf]
  %v735 = vld [vmem:[%s3 + $0x4] sm:$0xf]
  %v736 = vld [vmem:[%s3 + $0x8] sm:$0xf]
  %v737 = vld [vmem:[%s3 + $0xc] sm:$0xf]
  %v738 = vld [vmem:[%s3 + $0x10] sm:$0xf]
  %v739 = vld [vmem:[%s3 + $0x14] sm:$0xf]
  %v740 = vld [vmem:[%s3 + $0x18] sm:$0xf]
  %v741 = vld [vmem:[%s3 + $0x1c] sm:$0xf]
  %v742 = vld [vmem:[%s4 + $0x1] sm:$0x1]
  %v743 = vld [vmem:[%s4 + $0x2] sm:$0x1]
  %v744 = vld [vmem:[%s4 + $0x3] sm:$0x1]
  %v745 = vld [vmem:[%s4 + $0x4] sm:$0x1]
  %v746 = vpack.c.bf16 %v733, %v733
  %v747 = vlaneseq
  %v748 = vshrl.u32 %v747, 7
  %v749 = vsub.s32 0, %v748
  %v750 = vrot.slane %v742, %v749
  %752 = vrot.lane.b32.xlu0 %v746, 32
  %v753 = vpop.permute.xlu0 %752
  %v758 = vunpack.c.l.b16 %v734
  %v759 = vunpack.c.l.b16 %v735
  %v760 = vunpack.c.l.b16 %v736
  %v761 = vunpack.c.l.b16 %v737
  %v762 = vpack.c.b16 %v759, %v758
  %v763 = vpack.c.b16 %v761, %v760
  %v767 = vsel %vm153, %v753, 0
  %769 = vmatprep.subr.bf16.mxu0 0
  %770 = vmatpush1.bf16.msra.mxu0 %v762
  %771 = vmatprep.subr.bf16.mxu0 0
  %772 = vmatpush1.bf16.msra.mxu0 %v763
  %773 = vmatprep.subr.bf16.mxu0 0
  %774 = vmatpush1.bf16.msra.mxu0 0
  %775 = vmatprep.subr.bf16.mxu0 0
  %776 = vmatpush1.bf16.msra.mxu0 0
  %777 = vmatprep.subr.bf16.mxu0 0
  %778 = vmatpush1.bf16.msra.mxu0 0
  %779 = vmatprep.subr.bf16.mxu0 0
  %780 = vmatpush1.bf16.msra.mxu0 0
  %781 = vmatprep.subr.bf16.mxu0 0
  %782 = vmatpush1.bf16.msra.mxu0 0
  %783 = vmatprep.subr.bf16.mxu0 0
  %784 = vmatpush1.bf16.msra.mxu0 0
  %785 = vmatprep.subr.bf16.mxu0 0
  %786 = vmatpush1.bf16.msra.mxu0 0
  %787 = vmatprep.subr.bf16.mxu0 0
  %788 = vmatpush1.bf16.msra.mxu0 0
  %789 = vmatprep.subr.bf16.mxu0 0
  %790 = vmatpush1.bf16.msra.mxu0 0
  %791 = vmatprep.subr.bf16.mxu0 0
  %792 = vmatpush1.bf16.msra.mxu0 0
  %793 = vmatprep.subr.bf16.mxu0 0
  %794 = vmatpush1.bf16.msra.mxu0 0
  %795 = vmatprep.subr.bf16.mxu0 0
  %796 = vmatpush1.bf16.msra.mxu0 0
  %797 = vmatprep.subr.bf16.mxu0 0
  %798 = vmatpush1.bf16.msra.mxu0 0
  %799 = vmatprep.subr.bf16.mxu0 0
  %800 = vmatpush1.bf16.msra.mxu0 0
  %801 = vmatprep.mubr.bf16.mxu0 0
  %802 = vmatmul.mubr.bf16.gmra.mrb[0].mxu0 %v767
  %v803 = vpop.f32.mrb[0].mxu0
  %v804 = vadd.f32 %v750, %v803
  %v805 = vpop.f32.mrb[0].mxu0
  %v806 = vpop.f32.mrb[0].mxu0
  %v807 = vpop.f32.mrb[0].mxu0
  %808 = vdwg.mxu0
  %v809 = vmax.f32 %v804, 0.0
  %v810 = vpack.c.bf16 %v809, %v809
  %v811 = vlaneseq
  %v812 = vshrl.u32 %v811, 7
  %v813 = vsub.s32 0, %v812
  %v814 = vrot.slane %v743, %v813
  %v819 = vunpack.c.l.b16 %v738
  %v820 = vunpack.c.l.b16 %v739
  %v821 = vunpack.c.l.b16 %v740
  %v822 = vunpack.c.l.b16 %v741
  %v823 = vpack.c.b16 %v820, %v819
  %v824 = vpack.c.b16 %v822, %v821
  %v828 = vsel %vm153, %v810, 0
  %830 = vmatprep.subr.bf16.mxu0 0
  %831 = vmatpush1.bf16.msra.mxu0 %v823
  %832 = vmatprep.subr.bf16.mxu0 0
  %833 = vmatpush1.bf16.msra.mxu0 %v824
  %834 = vmatprep.subr.bf16.mxu0 0
  %835 = vmatpush1.bf16.msra.mxu0 0
  %836 = vmatprep.subr.bf16.mxu0 0
  %837 = vmatpush1.bf16.msra.mxu0 0
  %838 = vmatprep.subr.bf16.mxu0 0
  %839 = vmatpush1.bf16.msra.mxu0 0
  %840 = vmatprep.subr.bf16.mxu0 0
  %841 = vmatpush1.bf16.msra.mxu0 0
  %842 = vmatprep.subr.bf16.mxu0 0
  %843 = vmatpush1.bf16.msra.mxu0 0
  %844 = vmatprep.subr.bf16.mxu0 0
  %845 = vmatpush1.bf16.msra.mxu0 0
  %846 = vmatprep.subr.bf16.mxu0 0
  %847 = vmatpush1.bf16.msra.mxu0 0
  %848 = vmatprep.subr.bf16.mxu0 0
  %849 = vmatpush1.bf16.msra.mxu0 0
  %850 = vmatprep.subr.bf16.mxu0 0
  %851 = vmatpush1.bf16.msra.mxu0 0
  %852 = vmatprep.subr.bf16.mxu0 0
  %853 = vmatpush1.bf16.msra.mxu0 0
  %854 = vmatprep.subr.bf16.mxu0 0
  %855 = vmatpush1.bf16.msra.mxu0 0
  %856 = vmatprep.subr.bf16.mxu0 0
  %857 = vmatpush1.bf16.msra.mxu0 0
  %858 = vmatprep.subr.bf16.mxu0 0
  %859 = vmatpush1.bf16.msra.mxu0 0
  %860 = vmatprep.subr.bf16.mxu0 0
  %861 = vmatpush1.bf16.msra.mxu0 0
  %862 = vmatprep.mubr.bf16.mxu0 0
  %863 = vmatmul.mubr.bf16.gmra.mrb[0].mxu0 %v828
  %v864 = vpop.f32.mrb[0].mxu0
  %v865 = vadd.f32 %v814, %v864
  %v866 = vpop.f32.mrb[0].mxu0
  %v867 = vpop.f32.mrb[0].mxu0
  %v868 = vpop.f32.mrb[0].mxu0
  %869 = vdwg.mxu0
  %v870 = vmax.f32 %v865, 0.0
  %v871 = vlaneseq
  %v872 = vshrl.u32 %v871, 7
  %v873 = vsub.s32 0, %v872
  %v874 = vrot.slane %v744, %v873
  %v875 = vmul.f32 %v870, %v874
  %v876 = vsel %vm153, %v875, 0.0
  %877 = vadd.xlane.f32.xlu0 %v876
  %v878 = vpop.xlane.xlu0 %877
  %v879 = vlaneseq
  %v880 = vshrl.u32 %v879, 7
  %v881 = vsub.s32 0, %v880
  %v882 = vrot.slane %v745, %v881
  %v883 = vadd.f32 %v878, %v882
  %v884 = vxor.u32 %v883, 2147483648
  %v885 = vmul.f32 %v884, 1.442695
  %v886 = vpow.pop %v885
  %v887 = vadd.f32 %v886, 1.0
  %v888 = vrcp.pop %v887
  %v889 = vmul.f32 1.0, %v888
  %vm890 = vcmask 7168
  %891 = vst.msk [vmem:[%s5] sm:$0xff] %vm890, %v889
  // Predicated region
  $region22: #{lstm_network_forward.1} parent=0 // pred_check
    _
  $region23: #{lstm_network_forward.1} parent=0 // pred_check_branch
    %893 = sbr.rel (0) target = $region25
  $region24: #{lstm_network_forward.1} parent=0 // pred_region
    _
  $region25: #{lstm_network_forward.1} parent=0 // pred_fallthru
    _
  // Predicated region
  $region26: #{lstm_network_forward.1} parent=0 // pred_check
    _
  $region27: #{lstm_network_forward.1} parent=0 // pred_check_branch
    %895 = sbr.rel (0) target = $region29
  $region28: #{lstm_network_forward.1} parent=0 // pred_region
    _
  $region29: #{lstm_network_forward.1} parent=0 // pred_fallthru
    _

</llo_original>
